<compile_context>
chip_gen: v5e
topology: v5e:2x2
jax: 0.10.0
libtpu: 0.0.40
codegen_flags: <defaults>
</compile_context>

<pallas_src>
import functools

import jax
import jax.numpy as jnp
from jax.experimental import pallas as pl
from jax.experimental.pallas import tpu as pltpu


def _charbonnier_sum_kernel(x_ref, y_ref, o_ref, *, eps, n_blocks,
                            blocks_per_core, block_rows, chunk_rows,
                            rows_in_last, has_phantom):
    k = pl.program_id(1)          # reduction axis (row-blocks for this core)

    @pl.when(k == 0)
    def _init():
        o_ref[...] = jnp.zeros_like(o_ref)

    eps2 = jnp.float32(eps * eps)
    n_chunks = block_rows // chunk_rows
    folds = chunk_rows // 8

    def block_partial(valid_rows):
        # valid_rows is a static int; block-local rows >= valid_rows are
        # discarded via a select (NOT a multiplicative mask), so Inf/NaN in
        # the undefined out-of-bounds region of a ragged last block can never
        # propagate into the sum.
        def body(c, acc):
            r0 = pl.multiple_of(c * chunk_rows, chunk_rows)
            xd = x_ref[pl.ds(r0, chunk_rows), :].astype(jnp.float32)
            yd = y_ref[pl.ds(r0, chunk_rows), :].astype(jnp.float32)
            d = xd - yd
            v = jnp.sqrt(d * d + eps2)
            if valid_rows < block_rows:
                row = r0 + jax.lax.broadcasted_iota(jnp.int32, v.shape, 0)
                v = jnp.where(row < valid_rows, v, jnp.float32(0.0))
            # Fold (chunk_rows, 128) -> (8, 128): vreg-wise VPU adds only.
            return acc + v.reshape(folds, 8, 128).sum(axis=0)

        return jax.lax.fori_loop(0, n_chunks, body,
                                 jnp.zeros((8, 128), jnp.float32))

    ragged = rows_in_last != block_rows

    if not has_phantom and not ragged:
        # Every grid step maps to a full, valid block: unconditional add.
        o_ref[...] += block_partial(block_rows)
    else:
        b = pl.program_id(0) * blocks_per_core + k   # global row-block index
        last_full = n_blocks - 1 if ragged else n_blocks

        @pl.when(b < last_full)
        def _full():
            o_ref[...] += block_partial(block_rows)

        if ragged:
            @pl.when(b == n_blocks - 1)
            def _last():
                o_ref[...] += block_partial(rows_in_last)


def _default_num_parallel():
    # Two TensorCores per chip only on v7x; one on v5e/v6e (and older).
    try:
        kind = jax.devices()[0].device_kind.lower()
    except Exception:
        return 1
    return 2 if ("v7" in kind or "7x" in kind) else 1


def charbonnier_loss(x, y, eps=1e-3, *, target_step_bytes=8 << 20,
                     block_rows=None, num_parallel=None):
    """Pallas TPU Charbonnier loss: mean(sqrt((x - y)^2 + eps^2))."""
    assert x.shape == y.shape, "x and y must have the same shape"
    total = int(x.size)
    assert total > 0
    eps = float(eps)
    eps_f = jnp.float32(eps)

    xf = x.reshape(-1)
    yf = y.reshape(-1)

    # Split off the (< 8*128) unaligned remainder and sum it with plain jnp;
    # this avoids jnp.pad, which would round-trip BOTH full inputs through HBM.
    ALIGN = 8 * 128
    main = (total // ALIGN) * ALIGN
    rem = total - main
    if rem:
        dt = xf[main:].astype(jnp.float32) - yf[main:].astype(jnp.float32)
        tail_sum = jnp.sum(jnp.sqrt(dt * dt + eps_f * eps_f))
    else:
        tail_sum = None

    if main == 0:
        # Tiny input (< 1024 elements): nothing left for the kernel.
        return tail_sum / jnp.float32(total)

    rows = main // 128
    x2 = (xf if rem == 0 else xf[:main]).reshape(rows, 128)
    y2 = (yf if rem == 0 else yf[:main]).reshape(rows, 128)

    # Byte-targeted tile: ~target_step_bytes of HBM read per grid step across
    # both inputs (dtype-aware, so bf16 gets 2x the rows of f32).
    if block_rows is None:
        bytes_per_row = 128 * (x2.dtype.itemsize + y2.dtype.itemsize)
        block_rows = max(8, target_step_bytes // bytes_per_row)
    block_rows = max(8, (min(int(block_rows), rows) // 8) * 8)

    # Chunked accumulation inside the block keeps intermediates to a few vregs.
    if block_rows >= 256:
        chunk_rows = 256
        block_rows = (block_rows // chunk_rows) * chunk_rows
    else:
        chunk_rows = block_rows

    n_blocks = pl.cdiv(rows, block_rows)
    rows_in_last = rows - (n_blocks - 1) * block_rows

    # Megacore split (v7x): each parallel index reduces its own share of the
    # row-blocks into its own (8, 128) output slab.
    if num_parallel is None:
        num_parallel = _default_num_parallel()
    P = num_parallel if n_blocks >= num_parallel else 1
    blocks_per_core = pl.cdiv(n_blocks, P)
    has_phantom = P * blocks_per_core != n_blocks

    if has_phantom:
        # Clamp phantom trailing blocks of the last core onto a valid block;
        # their contribution is skipped inside the kernel.
        def in_index_map(p, k):
            return (jnp.minimum(p * blocks_per_core + k, n_blocks - 1), 0)
    else:
        def in_index_map(p, k):
            return (p * blocks_per_core + k, 0)

    kernel = functools.partial(
        _charbonnier_sum_kernel,
        eps=eps,
        n_blocks=n_blocks,
        blocks_per_core=blocks_per_core,
        block_rows=block_rows,
        chunk_rows=chunk_rows,
        rows_in_last=rows_in_last,
        has_phantom=has_phantom,
    )

    cost = pl.CostEstimate(
        flops=3 * main,
        transcendentals=main,
        bytes_accessed=main * (x2.dtype.itemsize + y2.dtype.itemsize)
        + P * 8 * 128 * 4,
    )

    partial_sums = pl.pallas_call(
        kernel,
        out_shape=jax.ShapeDtypeStruct((P * 8, 128), jnp.float32),
        grid=(P, blocks_per_core),
        in_specs=[
            pl.BlockSpec((block_rows, 128), in_index_map),
            pl.BlockSpec((block_rows, 128), in_index_map),
        ],
        out_specs=pl.BlockSpec((8, 128), lambda p, k: (p, 0)),
        compiler_params=pltpu.CompilerParams(
            dimension_semantics=("parallel", "arbitrary"),
            vmem_limit_bytes=32 * 1024 * 1024,
        ),
        cost_estimate=cost,
    )(x2, y2)

    total_sum = jnp.sum(partial_sums)
    if tail_sum is not None:
        total_sum = total_sum + tail_sum
    # Divide once in the wrapper.
    return total_sum / jnp.float32(total)


if __name__ == "__main__":
    key = jax.random.PRNGKey(0)
    kx, ky = jax.random.split(key)

    eps = 1e-3

    def ref_loss(a, b):
        d = a.astype(jnp.float32) - b.astype(jnp.float32)
        return jnp.mean(jnp.sqrt(d * d + jnp.float32(eps) ** 2))

    # Small NCHW inputs consistent with an image-restoration loss.
    x = jax.random.normal(kx, (2, 4, 16, 16), dtype=jnp.float32)
    y = jax.random.normal(ky, (2, 4, 16, 16), dtype=jnp.float32)
    loss = jax.block_until_ready(charbonnier_loss(x, y, eps=eps))
    assert jnp.allclose(loss, ref_loss(x, y), rtol=1e-5, atol=1e-6), loss

    # Unaligned size -> <1024-element remainder handled in the wrapper; also
    # exercise the multi-block path with a small forced tile.
    x2 = jax.random.normal(kx, (2, 3, 20, 20), dtype=jnp.float32)
    y2 = jax.random.normal(ky, (2, 3, 20, 20), dtype=jnp.float32)
    loss2 = jax.block_until_ready(charbonnier_loss(x2, y2, eps=eps, block_rows=8))
    assert jnp.allclose(loss2, ref_loss(x2, y2), rtol=1e-5, atol=1e-6), loss2

    # Ragged last row-block (rows=24, block_rows=16 -> last block has 8 rows).
    x3 = jax.random.normal(kx, (2, 3, 16, 32), dtype=jnp.float32)
    y3 = jax.random.normal(ky, (2, 3, 16, 32), dtype=jnp.float32)
    loss3 = jax.block_until_ready(charbonnier_loss(x3, y3, eps=eps, block_rows=16))
    assert jnp.allclose(loss3, ref_loss(x3, y3), rtol=1e-5, atol=1e-6), loss3

    # Phantom-block path: 3 row-blocks split over 2 parallel slots.
    loss4 = jax.block_until_ready(
        charbonnier_loss(x3, y3, eps=eps, block_rows=8, num_parallel=2))
    assert jnp.allclose(loss4, ref_loss(x3, y3), rtol=1e-5, atol=1e-6), loss4

    # bf16 inputs stream as bf16 (half the HBM traffic) and upcast in-kernel.
    xb = x.astype(jnp.bfloat16)
    yb = y.astype(jnp.bfloat16)
    loss_bf16 = jax.block_until_ready(charbonnier_loss(xb, yb, eps=eps))
    assert jnp.allclose(loss_bf16, ref_loss(xb, yb), rtol=1e-5, atol=1e-6), loss_bf16

    print("KERNEL_OK")
</pallas_src>

<mosaic_0001>
module attributes {stable_mosaic.version = 11 : i64} {
  func.func @_charbonnier_sum_kernel(%arg0: i32, %arg1: i32, %arg2: memref<16x128xf32, #tpu.memory_space<vmem>>, %arg3: memref<16x128xf32, #tpu.memory_space<vmem>>, %arg4: memref<8x128xf32, #tpu.memory_space<vmem>>) attributes {dimension_semantics = [#tpu.dimension_semantics<parallel>, #tpu.dimension_semantics<arbitrary>], iteration_bounds = array<i64: 1, 1>, scalar_prefetch = 0 : i64, scratch_operands = 0 : i64, tpu.core_type = #tpu.core_type<tc>, window_params = [{transform_indices = @transform_0, window_bounds = array<i64: 16, 128>}, {transform_indices = @transform_1, window_bounds = array<i64: 16, 128>}, {transform_indices = @transform_2, window_bounds = array<i64: 8, 128>}]} {
    %c0_i32 = arith.constant 0 : i32
    %0 = arith.cmpi eq, %arg1, %c0_i32 : i32
    %1 = arith.extui %0 : i1 to i32
    %c0_i32_0 = arith.constant 0 : i32
    %2 = arith.cmpi ne, %1, %c0_i32_0 : i32
    scf.if %2 {
      %cst_9 = arith.constant 0.000000e+00 : f32
      %21 = vector.broadcast %cst_9 : f32 to vector<8x128xf32>
      %c0_10 = arith.constant 0 : index
      %c0_11 = arith.constant 0 : index
      %22 = vector.load %arg4[%c0_10, %c0_11] : memref<8x128xf32, #tpu.memory_space<vmem>>, vector<8x128xf32>
      tpu.vector_store %arg4[%c0_10, %c0_11], %21 {strides = array<i32>} : memref<8x128xf32, #tpu.memory_space<vmem>>, vector<8x128xf32>,
    } else {
    }
    %c0 = arith.constant 0 : index
    %c0_1 = arith.constant 0 : index
    %3 = vector.load %arg4[%c0, %c0_1] : memref<8x128xf32, #tpu.memory_space<vmem>>, vector<8x128xf32>
    %cst = arith.constant 0.000000e+00 : f32
    %4 = vector.broadcast %cst : f32 to vector<8x128xf32>
    %cst_2 = arith.constant 9.99999997E-7 : f32
    %c0_i32_3 = arith.constant 0 : i32
    %c16_i32 = arith.constant 16 : i32
    %5 = arith.muli %c0_i32_3, %c16_i32 : i32
    %6 = tpu.assume_multiple %5, 16 : i32
    %7 = arith.index_cast %6 : i32 to index
    %c0_4 = arith.constant 0 : index
    %8 = vector.load %arg2[%7, %c0_4] : memref<16x128xf32, #tpu.memory_space<vmem>>, vector<16x128xf32>
    %9 = arith.index_cast %6 : i32 to index
    %c0_5 = arith.constant 0 : index
    %10 = vector.load %arg3[%9, %c0_5] : memref<16x128xf32, #tpu.memory_space<vmem>>, vector<16x128xf32>
    %11 = arith.subf %8, %10 : vector<16x128xf32>
    %12 = arith.mulf %11, %11 : vector<16x128xf32>
    %13 = vector.broadcast %cst_2 : f32 to vector<16x128xf32>
    %14 = arith.addf %12, %13 : vector<16x128xf32>
    %15 = math.sqrt %14 : vector<16x128xf32>
    %16 = vector.shape_cast %15 : vector<16x128xf32> to vector<2x8x128xf32>
    %cst_6 = arith.constant dense<0.000000e+00> : vector<8x128xf32>
    %17 = vector.multi_reduction <add>, %16, %cst_6 [0] : vector<2x8x128xf32> to vector<8x128xf32>
    %18 = arith.addf %4, %17 : vector<8x128xf32>
    %c1_i32 = arith.constant 1 : i32
    %19 = arith.addf %3, %18 : vector<8x128xf32>
    %c0_7 = arith.constant 0 : index
    %c0_8 = arith.constant 0 : index
    %20 = vector.load %arg4[%c0_7, %c0_8] : memref<8x128xf32, #tpu.memory_space<vmem>>, vector<8x128xf32>
    tpu.vector_store %arg4[%c0_7, %c0_8], %19 {strides = array<i32>} : memref<8x128xf32, #tpu.memory_space<vmem>>, vector<8x128xf32>,
    return
  }
  func.func @transform_0(%arg0: i32, %arg1: i32) -> (i32, i32) {
    %c1_i32 = arith.constant 1 : i32
    %0 = arith.muli %arg0, %c1_i32 : i32
    %1 = arith.addi %0, %arg1 : i32
    %c0_i32 = arith.constant 0 : i32
    %c0_i32_0 = arith.constant 0 : i32
    return %1, %c0_i32 : i32, i32
  }
  func.func @transform_1(%arg0: i32, %arg1: i32) -> (i32, i32) {
    %c1_i32 = arith.constant 1 : i32
    %0 = arith.muli %arg0, %c1_i32 : i32
    %1 = arith.addi %0, %arg1 : i32
    %c0_i32 = arith.constant 0 : i32
    %c0_i32_0 = arith.constant 0 : i32
    return %1, %c0_i32 : i32, i32
  }
  func.func @transform_2(%arg0: i32, %arg1: i32) -> (i32, i32) {
    %c0_i32 = arith.constant 0 : i32
    %c0_i32_0 = arith.constant 0 : i32
    return %arg0, %c0_i32 : i32, i32
  }
}

</mosaic_0001>

<llo_original>
// kernel: tpu_custom_call.1
$region0: #{tpu_custom_call.1}
  #allocation0 [shape = 'u32[]', space=smem, size = 0x4, offset = 0x4, fixed_abs, tag = 'smem constant byte address 0x4 - core index']
  #allocation1 [shape = 'u32[72,128]{1,0:T(1,128)}', space=vmem, size = 0x9000, scoped, tag = 'internal scratch']
  %s0 = inlined_call_operand.hbm [shape: f32[16,128], index: 0, kind: input, shape index: {}]
  %s1 = inlined_call_operand.hbm [shape: f32[16,128], index: 1, kind: input, shape index: {}]
  %s2 = inlined_call_operand.hbm [shape: f32[8,128], index: 2, kind: output, shape index: {}]
  %s3 = sld [smem:[#allocation0]]
  $region30: #{tpu_custom_call.1} parent=0
    _
  %s5 = ssub.s32 1, %s3
  %s6 = scalar_select 0, %s5, %s3
  $region1: #{tpu_custom_call.1} parent=0
    #allocation2 [shape = 'u8[8192]{0}', space=vmem, size = 0x2000, scoped, tag = 'input window, operand 0, single buffered']
    #allocation3 [shape = 's32[1]{0}', space=sflag, size = 0x4, scoped, tag = 'scoped memory for tpu_custom_call.1']
    #allocation4 [shape = 's32[1]{0}', space=sflag, size = 0x4, scoped, tag = 'scoped memory for tpu_custom_call.1']
    #allocation5 [shape = 'u8[8192]{0}', space=vmem, size = 0x2000, scoped, tag = 'input window, operand 1, single buffered']
    #allocation6 [shape = 's32[1]{0}', space=sflag, size = 0x4, scoped, tag = 'scoped memory for tpu_custom_call.1']
    #allocation7 [shape = 'u8[4096]{0}', space=vmem, size = 0x1000, scoped, tag = 'output window, operand 0, single buffered']
    %7 = vsyncpa [#allocation3], 0
    %8 = vsyncpa [#allocation6], 0
    %9 = vsyncpa [#allocation4], 0
    // Predicated region
    $region2: #{tpu_custom_call.1} parent=1 // pred_check
      _
    $region3: #{tpu_custom_call.1} parent=1 // pred_check_branch
      %11 = sbr.rel (0) target = $region5
    $region4: #{tpu_custom_call.1} parent=1 // pred_region
      %s12 = sadd.s32 0, 0
      %s13 = smul.u32 2, %s12
      %15 = vsyncadd [#allocation3], 0
      %s16 = smul.addr %s13, 8
      %s17 = scalar_lea.hbm %s0, %s16
      %s18 = sshll.u32 %s17, 4
      %s19 = int_to_ptr.hbm [resolvable:$true] %s18
      %s20 = sshll.u32 [#allocation2], 4
      %s21 = int_to_ptr.vmem [resolvable:$true] %s20
      %26 = dma.hbm_to_vmem [thread:$0]  %s19, 256, %s21, [#allocation3], 128, 128, 8
    $region5: #{tpu_custom_call.1} parent=1 // pred_fallthru
      _
    // Predicated region
    $region6: #{tpu_custom_call.1} parent=1 // pred_check
      _
    $region7: #{tpu_custom_call.1} parent=1 // pred_check_branch
      %28 = sbr.rel (0) target = $region9
    $region8: #{tpu_custom_call.1} parent=1 // pred_region
      %s29 = sadd.s32 0, 0
      %s30 = smul.u32 2, %s29
      %32 = vsyncadd [#allocation6], 0
      %s33 = smul.addr %s30, 8
      %s34 = scalar_lea.hbm %s1, %s33
      %s35 = sshll.u32 %s34, 4
      %s36 = int_to_ptr.hbm [resolvable:$true] %s35
      %s37 = sshll.u32 [#allocation5], 4
      %s38 = int_to_ptr.vmem [resolvable:$true] %s37
      %43 = dma.hbm_to_vmem [thread:$0]  %s36, 256, %s38, [#allocation6], 128, 128, 8
    $region9: #{tpu_custom_call.1} parent=1 // pred_fallthru
      _
    // Predicated region
    $region10: #{tpu_custom_call.1} parent=1 // pred_check
      _
    $region11: #{tpu_custom_call.1} parent=1 // pred_check_branch
      %45 = sbr.rel (0) target = $region13
    $region12: #{tpu_custom_call.1} parent=1 // pred_region
      %47 = dma.done [#allocation3], 256
    $region13: #{tpu_custom_call.1} parent=1 // pred_fallthru
      _
    // Predicated region
    $region14: #{tpu_custom_call.1} parent=1 // pred_check
      _
    $region15: #{tpu_custom_call.1} parent=1 // pred_check_branch
      %49 = sbr.rel (0) target = $region17
    $region16: #{tpu_custom_call.1} parent=1 // pred_region
      %51 = dma.done [#allocation6], 256
    $region17: #{tpu_custom_call.1} parent=1 // pred_fallthru
      _
    %s52 = sadd.s32 0, 0
    %s53 = smul.u32 2, %s52
    %s54 = sadd.s32 0, 0
    %s55 = smul.u32 2, %s54
    %p56 = scmp.eq.s32.totalorder 0, 0
    // Predicated region
    $region18: #{tpu_custom_call.1} parent=1 // pred_check
      %p57 = pneg %p56
    $region19: #{tpu_custom_call.1} parent=1 // pred_check_branch
      %59 = sbr.rel (%p57) target = $region21
    $region20: #{tpu_custom_call.1} parent=1 // pred_region
      %60 = vst [vmem:[#allocation7] sm:$0xff] 0.0
    $region21: #{tpu_custom_call.1} parent=1 // pred_fallthru
      _
    %v61 = vld [vmem:[#allocation7] sm:$0xff]
    %v62 = vld [vmem:[#allocation2] sm:$0xff]
    %v63 = vld [vmem:[#allocation2 + $0x8] sm:$0xff]
    %v64 = vld [vmem:[#allocation5] sm:$0xff]
    %v65 = vld [vmem:[#allocation5 + $0x8] sm:$0xff]
    %v66 = vsub.f32 %v62, %v64
    %v67 = vsub.f32 %v63, %v65
    %v68 = vmul.f32 %v66, %v66
    %v69 = vmul.f32 %v67, %v67
    %v70 = vadd.f32 %v68, 1e-06
    %v71 = vadd.f32 %v69, 1e-06
    %v72 = vrsqrt.pop %v70
    %v73 = vmul.f32 %v72, %v70
    %v74 = vmul.f32 %v73, %v72
    %v75 = vmul.f32 0.5, %v74
    %v76 = vsub.f32 1.5, %v75
    %v77 = vmul.f32 %v72, %v76
    %v78 = vmul.f32 %v70, %v77
    %vm79 = vcmp.eq.f32.partialorder %v70, inf
    %v80 = vsel %vm79, %v70, %v78
    %vm81 = vcmp.eq.f32.partialorder %v70, 0.0
    %v82 = vand.u32 %v70, 2147483648
    %v83 = vsel %vm81, %v82, %v80
    %v84 = vrsqrt.pop %v71
    %v85 = vmul.f32 %v84, %v71
    %v86 = vmul.f32 %v85, %v84
    %v87 = vmul.f32 0.5, %v86
    %v88 = vsub.f32 1.5, %v87
    %v89 = vmul.f32 %v84, %v88
    %v90 = vmul.f32 %v71, %v89
    %vm91 = vcmp.eq.f32.partialorder %v71, inf
    %v92 = vsel %vm91, %v71, %v90
    %vm93 = vcmp.eq.f32.partialorder %v71, 0.0
    %v94 = vand.u32 %v71, 2147483648
    %v95 = vsel %vm93, %v94, %v92
    %v96 = vadd.f32 %v83, %v95
    %v97 = vadd.f32 %v96, 0.0
    %v98 = vadd.f32 %v61, %v97
    %99 = vst [vmem:[#allocation7] sm:$0xff] %v98
    // Predicated region
    $region22: #{tpu_custom_call.1} parent=1 // pred_check
      _
    $region23: #{tpu_custom_call.1} parent=1 // pred_check_branch
      %101 = sbr.rel (0) target = $region25
    $region24: #{tpu_custom_call.1} parent=1 // pred_region
      %103 = vsyncadd [#allocation4], 0
      %s105 = sshll.u32 [#allocation7], 4
      %s106 = int_to_ptr.vmem [resolvable:$true] %s105
      %s107 = sshll.u32 %s2, 4
      %s108 = int_to_ptr.hbm [resolvable:$true] %s107
      %110 = dma.vmem_to_hbm [thread:$0]  %s106, 128, %s108, [#allocation4]
    $region25: #{tpu_custom_call.1} parent=1 // pred_fallthru
      _
    // Predicated region
    $region26: #{tpu_custom_call.1} parent=1 // pred_check
      _
    $region27: #{tpu_custom_call.1} parent=1 // pred_check_branch
      %112 = sbr.rel (0) target = $region29
    $region28: #{tpu_custom_call.1} parent=1 // pred_region
      %114 = dma.done [#allocation4], 128
    $region29: #{tpu_custom_call.1} parent=1 // pred_fallthru
      _
    %115 = vsyncpa [#allocation3], 1
    %116 = vsyncpa [#allocation6], 1
    %117 = vsyncpa [#allocation4], 1

</llo_original>
